<compile_context>
chip_gen: v5e
topology: v5e:2x2
jax: 0.10.0
libtpu: 0.0.40
codegen_flags: <defaults>
</compile_context>

<pallas_src>
import jax
import jax.numpy as jnp
from jax.experimental import pallas as pl
from jax.experimental.pallas import tpu as pltpu

_H1, _H2 = 512, 128  # hidden sizes from the PyTorch module


def _round_up(x, m):
    return (x + m - 1) // m * m


def _sublane_multiple(dtype):
    # Sub-32-bit dtypes pack along sublanes: 8 rows/vreg for f32, 16 for bf16, 32 for int8/fp8.
    return 32 // jnp.dtype(dtype).itemsize


def _pick_batch_tile(batch, sub):
    """Big tiles for MXU M-dim occupancy, but >=2 grid steps once B is large (v7x megacore)."""
    cap = 1024
    if batch <= sub:
        return sub
    if batch >= 2 * cap:
        return cap
    if batch >= 512:
        # split into (at least) two steps so both v7x TensorCores get work
        return _round_up(pl.cdiv(batch, 2), sub)
    return _round_up(batch, sub)


def _vmem_limit_bytes(batch_tile, d_in, d_out, compute_dtype, out_dtype):
    cb = jnp.dtype(compute_dtype).itemsize
    ob = jnp.dtype(out_dtype).itemsize
    stream = batch_tile * d_in * 4 * 2 + batch_tile * d_out * ob * 2      # x / out tiles, double-buffered
    weights = 2 * ((d_in * _H1 + _H1 * _H2 + _H2 * d_out) * cb
                   + (_H1 + _H2 + d_out) * 4)                              # resident weights + biases
    inter = batch_tile * (_H1 * (4 + cb) + _H2 * (4 + cb) + d_out * 4)     # h1/h2 (f32 + cast), out f32
    est = stream + weights + inter
    return int(min(max(2 * est + (4 << 20), 32 << 20), 64 << 20))


def mlp_kernel(x_ref, w1_ref, b1_ref, w2_ref, b2_ref, w3_ref, b3_ref, o_ref):
    cdt = w1_ref.dtype
    # In-kernel cast of the streaming operand (free VPU slot); x stays f32 in HBM.
    x = x_ref[...].astype(cdt)
    # Layer 1: Linear + ReLU (f32 accumulation on the MXU, f32 epilogue)
    h1 = jnp.dot(x, w1_ref[...], preferred_element_type=jnp.float32)
    h1 = jnp.maximum(h1 + b1_ref[...], 0.0)
    # Layer 2: Linear + ReLU
    h2 = jnp.dot(h1.astype(cdt), w2_ref[...], preferred_element_type=jnp.float32)
    h2 = jnp.maximum(h2 + b2_ref[...], 0.0)
    # Output layer: Linear (no activation); masked store of the real d_out columns.
    out = jnp.dot(h2.astype(cdt), w3_ref[...], preferred_element_type=jnp.float32)
    o_ref[...] = (out + b3_ref[...]).astype(o_ref.dtype)


def prepare_params(params, compute_dtype=jnp.bfloat16):
    """One-time weight prep (hoist the dtype cast out of the per-call path).

    compute_dtype: jnp.bfloat16 (native MXU path on v6e/v7x; also fine on v5e) or
    jnp.float32 (bit-exact vs. the f32 reference). Biases stay f32 (added after the
    f32 accumulation).
    """
    return {
        "w1": params["w1"].astype(compute_dtype), "b1": params["b1"].astype(jnp.float32),
        "w2": params["w2"].astype(compute_dtype), "b2": params["b2"].astype(jnp.float32),
        "w3": params["w3"].astype(compute_dtype), "b3": params["b3"].astype(jnp.float32),
    }


def feedforward_nn(x, prepped, *, batch_tile=None):
    """Fused 3-layer MLP as a single Pallas TPU kernel.

    x: [B, input_dim] float32; prepped: output of prepare_params().
    """
    w1, b1 = prepped["w1"], prepped["b1"]
    w2, b2 = prepped["w2"], prepped["b2"]
    w3, b3 = prepped["w3"], prepped["b3"]

    B, d_in = x.shape
    d_out = w3.shape[1]
    compute_dtype = w1.dtype
    out_dtype = x.dtype

    sub = _sublane_multiple(compute_dtype)
    if batch_tile is None:
        batch_tile = _pick_batch_tile(B, sub)
    batch_tile = max(sub, min(_round_up(batch_tile, sub), _round_up(B, sub)))

    grid = (pl.cdiv(B, batch_tile),)  # partial last block: Pallas masks its writeback

    # Weights / biases: same full block for every batch tile (resident in VMEM).
    full = lambda a: pl.BlockSpec(a.shape, lambda i: (0, 0))

    out = pl.pallas_call(
        mlp_kernel,
        out_shape=jax.ShapeDtypeStruct((B, d_out), out_dtype),
        grid_spec=pltpu.PrefetchScalarGridSpec(
            num_scalar_prefetch=0,
            grid=grid,
            in_specs=[
                pl.BlockSpec((batch_tile, d_in), lambda i: (i, 0)),  # x tile (f32 in HBM)
                full(w1), full(b1),
                full(w2), full(b2),
                full(w3), full(b3),
            ],
            out_specs=pl.BlockSpec((batch_tile, d_out), lambda i: (i, 0)),
        ),
        compiler_params=pltpu.CompilerParams(
            dimension_semantics=("parallel",),
            vmem_limit_bytes=_vmem_limit_bytes(batch_tile, d_in, d_out,
                                               compute_dtype, out_dtype)),
    )(x, w1, b1, w2, b2, w3, b3)
    return out


def init_params(key, input_dim, output_dim):
    """Deterministic parameter init (shapes match the module's nn.Linear layers)."""
    sizes = [input_dim, _H1, _H2, output_dim]
    params = {}
    keys = jax.random.split(key, len(sizes) - 1)
    for idx, (fan_in, fan_out) in enumerate(zip(sizes[:-1], sizes[1:]), start=1):
        kw, kb = jax.random.split(keys[idx - 1])
        bound = 1.0 / jnp.sqrt(fan_in)  # same scale as PyTorch nn.Linear default
        params[f"w{idx}"] = jax.random.uniform(
            kw, (fan_in, fan_out), jnp.float32, -bound, bound)
        params[f"b{idx}"] = jax.random.uniform(
            kb, (1, fan_out), jnp.float32, -bound, bound)
    return params


def reference_forward(x, params):
    h = jnp.maximum(x @ params["w1"] + params["b1"], 0.0)
    h = jnp.maximum(h @ params["w2"] + params["b2"], 0.0)
    return h @ params["w3"] + params["b3"]


if __name__ == "__main__":
    key = jax.random.PRNGKey(0)
    k_params, k_x = jax.random.split(key)

    batch, input_dim, output_dim = 16, 64, 16
    params = init_params(k_params, input_dim, output_dim)
    x = jax.random.normal(k_x, (batch, input_dim), jnp.float32)

    ref = reference_forward(x, params)

    # Exact-correctness path: f32 operands.
    out_f32 = jax.block_until_ready(feedforward_nn(x, prepare_params(params, jnp.float32)))
    assert out_f32.shape == (batch, output_dim)
    assert jnp.allclose(out_f32, ref, atol=1e-4, rtol=1e-4), "f32 mismatch vs. reference"

    # Recommended fast path on v6e/v7x: bf16 operands, f32 accumulation (looser tolerance).
    out_bf16 = jax.block_until_ready(feedforward_nn(x, prepare_params(params, jnp.bfloat16)))
    assert out_bf16.shape == (batch, output_dim)
    assert jnp.allclose(out_bf16, ref, atol=1e-1, rtol=1e-1), "bf16 mismatch vs. reference"

    print("KERNEL_OK")
</pallas_src>

<mosaic_0001>
module attributes {stable_mosaic.version = 11 : i64} {
  func.func @mlp_kernel(%arg0: i32, %arg1: memref<16x64xf32, #tpu.memory_space<vmem>>, %arg2: memref<64x512xf32, #tpu.memory_space<vmem>>, %arg3: memref<1x512xf32, #tpu.memory_space<vmem>>, %arg4: memref<512x128xf32, #tpu.memory_space<vmem>>, %arg5: memref<1x128xf32, #tpu.memory_space<vmem>>, %arg6: memref<128x16xf32, #tpu.memory_space<vmem>>, %arg7: memref<1x16xf32, #tpu.memory_space<vmem>>, %arg8: memref<16x16xf32, #tpu.memory_space<vmem>>) attributes {dimension_semantics = [#tpu.dimension_semantics<parallel>], iteration_bounds = array<i64: 1>, scalar_prefetch = 0 : i64, scratch_operands = 0 : i64, tpu.core_type = #tpu.core_type<tc>, window_params = [{transform_indices = @transform_0, window_bounds = array<i64: 16, 64>}, {pipeline_mode = #tpu.pipeline_mode<synchronous>, transform_indices = @transform_1, window_bounds = array<i64: 64, 512>}, {pipeline_mode = #tpu.pipeline_mode<synchronous>, transform_indices = @transform_2, window_bounds = array<i64: 1, 512>}, {pipeline_mode = #tpu.pipeline_mode<synchronous>, transform_indices = @transform_3, window_bounds = array<i64: 512, 128>}, {pipeline_mode = #tpu.pipeline_mode<synchronous>, transform_indices = @transform_4, window_bounds = array<i64: 1, 128>}, {pipeline_mode = #tpu.pipeline_mode<synchronous>, transform_indices = @transform_5, window_bounds = array<i64: 128, 16>}, {pipeline_mode = #tpu.pipeline_mode<synchronous>, transform_indices = @transform_6, window_bounds = array<i64: 1, 16>}, {transform_indices = @transform_7, window_bounds = array<i64: 16, 16>}]} {
    %c0 = arith.constant 0 : index
    %c0_0 = arith.constant 0 : index
    %0 = vector.load %arg1[%c0, %c0_0] : memref<16x64xf32, #tpu.memory_space<vmem>>, vector<16x64xf32>
    %c0_1 = arith.constant 0 : index
    %c0_2 = arith.constant 0 : index
    %1 = vector.load %arg2[%c0_1, %c0_2] : memref<64x512xf32, #tpu.memory_space<vmem>>, vector<64x512xf32>
    %cst = arith.constant dense<0.000000e+00> : vector<16x512xf32>
    %2 = tpu.matmul %0, %1, %cst {dimension_numbers = #tpu.dot_dimension_numbers<[1], [0], [0], [1], [0, 0, 1, 1], [], []>} : vector<16x64xf32>, vector<64x512xf32>, vector<16x512xf32> -> vector<16x512xf32>
    %c0_3 = arith.constant 0 : index
    %c0_4 = arith.constant 0 : index
    %3 = vector.load %arg3[%c0_3, %c0_4] : memref<1x512xf32, #tpu.memory_space<vmem>>, vector<1x512xf32>
    %4 = vector.broadcast %3 : vector<1x512xf32> to vector<16x512xf32>
    %5 = arith.addf %2, %4 : vector<16x512xf32>
    %cst_5 = arith.constant 0.000000e+00 : f32
    %6 = vector.broadcast %cst_5 : f32 to vector<16x512xf32>
    %7 = arith.maximumf %5, %6 : vector<16x512xf32>
    %c0_6 = arith.constant 0 : index
    %c0_7 = arith.constant 0 : index
    %8 = vector.load %arg4[%c0_6, %c0_7] : memref<512x128xf32, #tpu.memory_space<vmem>>, vector<512x128xf32>
    %cst_8 = arith.constant dense<0.000000e+00> : vector<16x128xf32>
    %9 = tpu.matmul %7, %8, %cst_8 {dimension_numbers = #tpu.dot_dimension_numbers<[1], [0], [0], [1], [0, 0, 1, 1], [], []>} : vector<16x512xf32>, vector<512x128xf32>, vector<16x128xf32> -> vector<16x128xf32>
    %c0_9 = arith.constant 0 : index
    %c0_10 = arith.constant 0 : index
    %10 = vector.load %arg5[%c0_9, %c0_10] : memref<1x128xf32, #tpu.memory_space<vmem>>, vector<1x128xf32>
    %11 = vector.broadcast %10 : vector<1x128xf32> to vector<16x128xf32>
    %12 = arith.addf %9, %11 : vector<16x128xf32>
    %cst_11 = arith.constant 0.000000e+00 : f32
    %13 = vector.broadcast %cst_11 : f32 to vector<16x128xf32>
    %14 = arith.maximumf %12, %13 : vector<16x128xf32>
    %c0_12 = arith.constant 0 : index
    %c0_13 = arith.constant 0 : index
    %15 = vector.load %arg6[%c0_12, %c0_13] : memref<128x16xf32, #tpu.memory_space<vmem>>, vector<128x16xf32>
    %cst_14 = arith.constant dense<0.000000e+00> : vector<16x16xf32>
    %16 = tpu.matmul %14, %15, %cst_14 {dimension_numbers = #tpu.dot_dimension_numbers<[1], [0], [0], [1], [0, 0, 1, 1], [], []>} : vector<16x128xf32>, vector<128x16xf32>, vector<16x16xf32> -> vector<16x16xf32>
    %c0_15 = arith.constant 0 : index
    %c0_16 = arith.constant 0 : index
    %17 = vector.load %arg7[%c0_15, %c0_16] : memref<1x16xf32, #tpu.memory_space<vmem>>, vector<1x16xf32>
    %18 = vector.broadcast %17 : vector<1x16xf32> to vector<16x16xf32>
    %19 = arith.addf %16, %18 : vector<16x16xf32>
    %c0_17 = arith.constant 0 : index
    %c0_18 = arith.constant 0 : index
    %20 = vector.load %arg8[%c0_17, %c0_18] : memref<16x16xf32, #tpu.memory_space<vmem>>, vector<16x16xf32>
    tpu.vector_store %arg8[%c0_17, %c0_18], %19 {strides = array<i32>} : memref<16x16xf32, #tpu.memory_space<vmem>>, vector<16x16xf32>,
    return
  }
  func.func @transform_0(%arg0: i32) -> (i32, i32) {
    %c0_i32 = arith.constant 0 : i32
    %c0_i32_0 = arith.constant 0 : i32
    return %arg0, %c0_i32 : i32, i32
  }
  func.func @transform_1(%arg0: i32) -> (i32, i32) {
    %c0_i32 = arith.constant 0 : i32
    %c0_i32_0 = arith.constant 0 : i32
    %c0_i32_1 = arith.constant 0 : i32
    return %c0_i32, %c0_i32_0 : i32, i32
  }
  func.func @transform_2(%arg0: i32) -> (i32, i32) {
    %c0_i32 = arith.constant 0 : i32
    %c0_i32_0 = arith.constant 0 : i32
    %c0_i32_1 = arith.constant 0 : i32
    return %c0_i32, %c0_i32_0 : i32, i32
  }
  func.func @transform_3(%arg0: i32) -> (i32, i32) {
    %c0_i32 = arith.constant 0 : i32
    %c0_i32_0 = arith.constant 0 : i32
    %c0_i32_1 = arith.constant 0 : i32
    return %c0_i32, %c0_i32_0 : i32, i32
  }
  func.func @transform_4(%arg0: i32) -> (i32, i32) {
    %c0_i32 = arith.constant 0 : i32
    %c0_i32_0 = arith.constant 0 : i32
    %c0_i32_1 = arith.constant 0 : i32
    return %c0_i32, %c0_i32_0 : i32, i32
  }
  func.func @transform_5(%arg0: i32) -> (i32, i32) {
    %c0_i32 = arith.constant 0 : i32
    %c0_i32_0 = arith.constant 0 : i32
    %c0_i32_1 = arith.constant 0 : i32
    return %c0_i32, %c0_i32_0 : i32, i32
  }
  func.func @transform_6(%arg0: i32) -> (i32, i32) {
    %c0_i32 = arith.constant 0 : i32
    %c0_i32_0 = arith.constant 0 : i32
    %c0_i32_1 = arith.constant 0 : i32
    return %c0_i32, %c0_i32_0 : i32, i32
  }
  func.func @transform_7(%arg0: i32) -> (i32, i32) {
    %c0_i32 = arith.constant 0 : i32
    %c0_i32_0 = arith.constant 0 : i32
    return %arg0, %c0_i32 : i32, i32
  }
}

</mosaic_0001>

<llo_original>
// kernel: tpu_custom_call.1
$region0: #{tpu_custom_call.1}
  #allocation0 [shape = 'u32[]', space=smem, size = 0x4, offset = 0x4, fixed_abs, tag = 'smem constant byte address 0x4 - core index']
  #allocation1 [shape = 'u32[72,128]{1,0:T(1,128)}', space=vmem, size = 0x9000, scoped, tag = 'internal scratch']
  %s0 = inlined_call_operand.vmem [shape: f32[16,64], index: 0, kind: input, shape index: {}]
  %s1 = inlined_call_operand.hbm [shape: f32[64,512], index: 1, kind: input, shape index: {}]
  %s2 = inlined_call_operand.vmem [shape: f32[1,512], index: 2, kind: input, shape index: {}]
  %s3 = inlined_call_operand.hbm [shape: f32[512,128], index: 3, kind: input, shape index: {}]
  %s4 = inlined_call_operand.vmem [shape: f32[1,128], index: 4, kind: input, shape index: {}]
  %s5 = inlined_call_operand.vmem [shape: f32[128,16], index: 5, kind: input, shape index: {}]
  %s6 = inlined_call_operand.vmem [shape: f32[1,16], index: 6, kind: input, shape index: {}]
  %s7 = inlined_call_operand.hbm [shape: f32[16,16], index: 7, kind: output, shape index: {}]
  %s8 = sld [smem:[#allocation0]]
  $region46: #{tpu_custom_call.1} parent=0
    _
  %s10 = ssub.s32 1, %s8
  %s11 = scalar_select 0, %s10, %s8
  $region1: #{tpu_custom_call.1} parent=0
    #allocation2 [shape = 'u8[131072]{0}', space=vmem, size = 0x20000, scoped, tag = 'input window, operand 1, single buffered']
    #allocation3 [shape = 's32[1]{0}', space=sflag, size = 0x4, scoped, tag = 'scoped memory for tpu_custom_call.1']
    #allocation4 [shape = 's32[1]{0}', space=sflag, size = 0x4, scoped, tag = 'scoped memory for tpu_custom_call.1']
    #allocation5 [shape = 'u8[262144]{0}', space=vmem, size = 0x40000, scoped, tag = 'input window, operand 3, single buffered']
    #allocation6 [shape = 's32[1]{0}', space=sflag, size = 0x4, scoped, tag = 'scoped memory for tpu_custom_call.1']
    #allocation7 [shape = 'u8[8192]{0}', space=vmem, size = 0x2000, scoped, tag = 'output window, operand 0, single buffered']
    %12 = vsyncpa [#allocation3], 0
    %13 = vsyncpa [#allocation6], 0
    %14 = vsyncpa [#allocation4], 0
    // Predicated region
    $region2: #{tpu_custom_call.1} parent=1 // pred_check
      _
    $region3: #{tpu_custom_call.1} parent=1 // pred_check_branch
      %16 = sbr.rel (0) target = $region5
    $region4: #{tpu_custom_call.1} parent=1 // pred_region
      _
    $region5: #{tpu_custom_call.1} parent=1 // pred_fallthru
      _
    // Predicated region
    $region6: #{tpu_custom_call.1} parent=1 // pred_check
      _
    $region7: #{tpu_custom_call.1} parent=1 // pred_check_branch
      %18 = sbr.rel (0) target = $region9
    $region8: #{tpu_custom_call.1} parent=1 // pred_region
      %20 = vsyncadd [#allocation3], 0
      %s21 = sshll.u32 %s1, 4
      %s22 = int_to_ptr.hbm [resolvable:$true] %s21
      %s23 = sshll.u32 [#allocation2], 4
      %s24 = int_to_ptr.vmem [resolvable:$true] %s23
      %29 = dma.hbm_to_vmem [thread:$0]  %s22, 4096, %s24, [#allocation3], 512, 512, 32
    $region9: #{tpu_custom_call.1} parent=1 // pred_fallthru
      _
    // Predicated region
    $region10: #{tpu_custom_call.1} parent=1 // pred_check
      _
    $region11: #{tpu_custom_call.1} parent=1 // pred_check_branch
      %31 = sbr.rel (0) target = $region13
    $region12: #{tpu_custom_call.1} parent=1 // pred_region
      _
    $region13: #{tpu_custom_call.1} parent=1 // pred_fallthru
      _
    // Predicated region
    $region14: #{tpu_custom_call.1} parent=1 // pred_check
      _
    $region15: #{tpu_custom_call.1} parent=1 // pred_check_branch
      %33 = sbr.rel (0) target = $region17
    $region16: #{tpu_custom_call.1} parent=1 // pred_region
      %35 = vsyncadd [#allocation6], 0
      %s36 = sshll.u32 %s3, 4
      %s37 = int_to_ptr.hbm [resolvable:$true] %s36
      %s38 = sshll.u32 [#allocation5], 4
      %s39 = int_to_ptr.vmem [resolvable:$true] %s38
      %44 = dma.hbm_to_vmem [thread:$0]  %s37, 8192, %s39, [#allocation6], 128, 128, 8
    $region17: #{tpu_custom_call.1} parent=1 // pred_fallthru
      _
    // Predicated region
    $region18: #{tpu_custom_call.1} parent=1 // pred_check
      _
    $region19: #{tpu_custom_call.1} parent=1 // pred_check_branch
      %46 = sbr.rel (0) target = $region21
    $region20: #{tpu_custom_call.1} parent=1 // pred_region
      _
    $region21: #{tpu_custom_call.1} parent=1 // pred_fallthru
      _
    // Predicated region
    $region22: #{tpu_custom_call.1} parent=1 // pred_check
      _
    $region23: #{tpu_custom_call.1} parent=1 // pred_check_branch
      %48 = sbr.rel (0) target = $region25
    $region24: #{tpu_custom_call.1} parent=1 // pred_region
      _
    $region25: #{tpu_custom_call.1} parent=1 // pred_fallthru
      _
    // Predicated region
    $region26: #{tpu_custom_call.1} parent=1 // pred_check
      _
    $region27: #{tpu_custom_call.1} parent=1 // pred_check_branch
      %50 = sbr.rel (0) target = $region29
    $region28: #{tpu_custom_call.1} parent=1 // pred_region
      _
    $region29: #{tpu_custom_call.1} parent=1 // pred_fallthru
      _
    // Predicated region
    $region30: #{tpu_custom_call.1} parent=1 // pred_check
      _
    $region31: #{tpu_custom_call.1} parent=1 // pred_check_branch
      %52 = sbr.rel (0) target = $region33
    $region32: #{tpu_custom_call.1} parent=1 // pred_region
      %54 = dma.done [#allocation3], 4096
    $region33: #{tpu_custom_call.1} parent=1 // pred_fallthru
      _
    // Predicated region
    $region34: #{tpu_custom_call.1} parent=1 // pred_check
      _
    $region35: #{tpu_custom_call.1} parent=1 // pred_check_branch
      %56 = sbr.rel (0) target = $region37
    $region36: #{tpu_custom_call.1} parent=1 // pred_region
      %58 = dma.done [#allocation6], 8192
    $region37: #{tpu_custom_call.1} parent=1 // pred_fallthru
      _
    %v59 = vld [vmem:[%s0] sm:$0xff]
    %v60 = vld [vmem:[%s0 + $0x8] sm:$0xff]
    %v61 = vld [vmem:[#allocation2] sm:$0xff]
    %v62 = vld [vmem:[#allocation2 + $0x8] sm:$0xff]
    %v63 = vld [vmem:[#allocation2 + $0x10] sm:$0xff]
    %v64 = vld [vmem:[#allocation2 + $0x18] sm:$0xff]
    %v65 = vld [vmem:[#allocation2 + $0x20] sm:$0xff]
    %v66 = vld [vmem:[#allocation2 + $0x28] sm:$0xff]
    %v67 = vld [vmem:[#allocation2 + $0x30] sm:$0xff]
    %v68 = vld [vmem:[#allocation2 + $0x38] sm:$0xff]
    %v69 = vld [vmem:[#allocation2 + $0x40] sm:$0xff]
    %v70 = vld [vmem:[#allocation2 + $0x48] sm:$0xff]
    %v71 = vld [vmem:[#allocation2 + $0x50] sm:$0xff]
    %v72 = vld [vmem:[#allocation2 + $0x58] sm:$0xff]
    %v73 = vld [vmem:[#allocation2 + $0x60] sm:$0xff]
    %v74 = vld [vmem:[#allocation2 + $0x68] sm:$0xff]
    %v75 = vld [vmem:[#allocation2 + $0x70] sm:$0xff]
    %v76 = vld [vmem:[#allocation2 + $0x78] sm:$0xff]
    %v77 = vld [vmem:[#allocation2 + $0x80] sm:$0xff]
    %v78 = vld [vmem:[#allocation2 + $0x88] sm:$0xff]
    %v79 = vld [vmem:[#allocation2 + $0x90] sm:$0xff]
    %v80 = vld [vmem:[#allocation2 + $0x98] sm:$0xff]
    %v81 = vld [vmem:[#allocation2 + $0xa0] sm:$0xff]
    %v82 = vld [vmem:[#allocation2 + $0xa8] sm:$0xff]
    %v83 = vld [vmem:[#allocation2 + $0xb0] sm:$0xff]
    %v84 = vld [vmem:[#allocation2 + $0xb8] sm:$0xff]
    %v85 = vld [vmem:[#allocation2 + $0xc0] sm:$0xff]
    %v86 = vld [vmem:[#allocation2 + $0xc8] sm:$0xff]
    %v87 = vld [vmem:[#allocation2 + $0xd0] sm:$0xff]
    %v88 = vld [vmem:[#allocation2 + $0xd8] sm:$0xff]
    %v89 = vld [vmem:[#allocation2 + $0xe0] sm:$0xff]
    %v90 = vld [vmem:[#allocation2 + $0xe8] sm:$0xff]
    %v91 = vld [vmem:[#allocation2 + $0xf0] sm:$0xff]
    %v92 = vld [vmem:[#allocation2 + $0xf8] sm:$0xff]
    %v93 = vld [vmem:[%s2] sm:$0xf]
    %v95 = vperm.slane %v93, 0
    %v96 = vperm.slane %v93, 1
    %v97 = vperm.slane %v93, 2
    %v98 = vperm.slane %v93, 3
    %vm103 = vcmask 523264
    %v105 = vsel %vm103, %v59, 0
    %v108 = vsel %vm103, %v60, 0
    %110 = vmatpush.msra.mxu0 0.0
    %111 = vmatpush.msra.mxu0 0.0
    %112 = vmatpush.msra.mxu0 0.0
    %113 = vmatpush.msra.mxu0 0.0
    %114 = vmatpush.msra.mxu0 0.0
    %115 = vmatpush.msra.mxu0 0.0
    %116 = vmatpush.msra.mxu0 0.0
    %117 = vmatpush.msra.mxu0 0.0
    %118 = vmatpush.msra.mxu0 %v89
    %119 = vmatpush.msra.mxu0 %v85
    %120 = vmatpush.msra.mxu0 %v81
    %121 = vmatpush.msra.mxu0 %v77
    %122 = vmatpush.msra.mxu0 %v73
    %123 = vmatpush.msra.mxu0 %v69
    %124 = vmatpush.msra.mxu0 %v65
    %125 = vmatpush.msra.mxu0 %v61
    %126 = vmatmul.f32.gmra.mxu0 %v105
    %v127 = vpop.f32.mrf.mxu0
    %v128 = vadd.f32 %v95, %v127
    %129 = vmatmul.f32.gmra.mxu0 %v108
    %v130 = vpop.f32.mrf.mxu0
    %v131 = vadd.f32 %v95, %v130
    %132 = vdwg.mxu0
    %133 = vmatpush.msra.mxu0 0.0
    %134 = vmatpush.msra.mxu0 0.0
    %135 = vmatpush.msra.mxu0 0.0
    %136 = vmatpush.msra.mxu0 0.0
    %137 = vmatpush.msra.mxu0 0.0
    %138 = vmatpush.msra.mxu0 0.0
    %139 = vmatpush.msra.mxu0 0.0
    %140 = vmatpush.msra.mxu0 0.0
    %141 = vmatpush.msra.mxu0 %v90
    %142 = vmatpush.msra.mxu0 %v86
    %143 = vmatpush.msra.mxu0 %v82
    %144 = vmatpush.msra.mxu0 %v78
    %145 = vmatpush.msra.mxu0 %v74
    %146 = vmatpush.msra.mxu0 %v70
    %147 = vmatpush.msra.mxu0 %v66
    %148 = vmatpush.msra.mxu0 %v62
    %149 = vmatmul.f32.gmra.mxu0 %v105
    %v150 = vpop.f32.mrf.mxu0
    %v151 = vadd.f32 %v96, %v150
    %152 = vmatmul.f32.gmra.mxu0 %v108
    %v153 = vpop.f32.mrf.mxu0
    %v154 = vadd.f32 %v96, %v153
    %155 = vdwg.mxu0
    %156 = vmatpush.msra.mxu0 0.0
    %157 = vmatpush.msra.mxu0 0.0
    %158 = vmatpush.msra.mxu0 0.0
    %159 = vmatpush.msra.mxu0 0.0
    %160 = vmatpush.msra.mxu0 0.0
    %161 = vmatpush.msra.mxu0 0.0
    %162 = vmatpush.msra.mxu0 0.0
    %163 = vmatpush.msra.mxu0 0.0
    %164 = vmatpush.msra.mxu0 %v91
    %165 = vmatpush.msra.mxu0 %v87
    %166 = vmatpush.msra.mxu0 %v83
    %167 = vmatpush.msra.mxu0 %v79
    %168 = vmatpush.msra.mxu0 %v75
    %169 = vmatpush.msra.mxu0 %v71
    %170 = vmatpush.msra.mxu0 %v67
    %171 = vmatpush.msra.mxu0 %v63
    %172 = vmatmul.f32.gmra.mxu0 %v105
    %v173 = vpop.f32.mrf.mxu0
    %v174 = vadd.f32 %v97, %v173
    %175 = vmatmul.f32.gmra.mxu0 %v108
    %v176 = vpop.f32.mrf.mxu0
    %v177 = vadd.f32 %v97, %v176
    %178 = vdwg.mxu0
    %179 = vmatpush.msra.mxu0 0.0
    %180 = vmatpush.msra.mxu0 0.0
    %181 = vmatpush.msra.mxu0 0.0
    %182 = vmatpush.msra.mxu0 0.0
    %183 = vmatpush.msra.mxu0 0.0
    %184 = vmatpush.msra.mxu0 0.0
    %185 = vmatpush.msra.mxu0 0.0
    %186 = vmatpush.msra.mxu0 0.0
    %187 = vmatpush.msra.mxu0 %v92
    %188 = vmatpush.msra.mxu0 %v88
    %189 = vmatpush.msra.mxu0 %v84
    %190 = vmatpush.msra.mxu0 %v80
    %191 = vmatpush.msra.mxu0 %v76
    %192 = vmatpush.msra.mxu0 %v72
    %193 = vmatpush.msra.mxu0 %v68
    %194 = vmatpush.msra.mxu0 %v64
    %195 = vmatmul.f32.gmra.mxu0 %v105
    %v196 = vpop.f32.mrf.mxu0
    %v197 = vadd.f32 %v98, %v196
    %198 = vmatmul.f32.gmra.mxu0 %v108
    %v199 = vpop.f32.mrf.mxu0
    %v200 = vadd.f32 %v98, %v199
    %201 = vdwg.mxu0
    %v202 = vmax.f32 %v128, 0.0
    %v203 = vmax.f32 %v151, 0.0
    %v204 = vmax.f32 %v174, 0.0
    %v205 = vmax.f32 %v197, 0.0
    %v206 = vmax.f32 %v131, 0.0
    %v207 = vmax.f32 %v154, 0.0
    %v208 = vmax.f32 %v177, 0.0
    %v209 = vmax.f32 %v200, 0.0
    %v210 = vld [vmem:[#allocation5] sm:$0xff]
    %v211 = vld [vmem:[#allocation5 + $0x8] sm:$0xff]
    %v212 = vld [vmem:[#allocation5 + $0x10] sm:$0xff]
    %v213 = vld [vmem:[#allocation5 + $0x18] sm:$0xff]
    %v214 = vld [vmem:[#allocation5 + $0x20] sm:$0xff]
    %v215 = vld [vmem:[#allocation5 + $0x28] sm:$0xff]
    %v216 = vld [vmem:[#allocation5 + $0x30] sm:$0xff]
    %v217 = vld [vmem:[#allocation5 + $0x38] sm:$0xff]
    %v218 = vld [vmem:[#allocation5 + $0x40] sm:$0xff]
    %v219 = vld [vmem:[#allocation5 + $0x48] sm:$0xff]
    %v220 = vld [vmem:[#allocation5 + $0x50] sm:$0xff]
    %v221 = vld [vmem:[#allocation5 + $0x58] sm:$0xff]
    %v222 = vld [vmem:[#allocation5 + $0x60] sm:$0xff]
    %v223 = vld [vmem:[#allocation5 + $0x68] sm:$0xff]
    %v224 = vld [vmem:[#allocation5 + $0x70] sm:$0xff]
    %v225 = vld [vmem:[#allocation5 + $0x78] sm:$0xff]
    %v226 = vld [vmem:[#allocation5 + $0x80] sm:$0xff]
    %v227 = vld [vmem:[#allocation5 + $0x88] sm:$0xff]
    %v228 = vld [vmem:[#allocation5 + $0x90] sm:$0xff]
    %v229 = vld [vmem:[#allocation5 + $0x98] sm:$0xff]
    %v230 = vld [vmem:[#allocation5 + $0xa0] sm:$0xff]
    %v231 = vld [vmem:[#allocation5 + $0xa8] sm:$0xff]
    %v232 = vld [vmem:[#allocation5 + $0xb0] sm:$0xff]
    %v233 = vld [vmem:[#allocation5 + $0xb8] sm:$0xff]
    %v234 = vld [vmem:[#allocation5 + $0xc0] sm:$0xff]
    %v235 = vld [vmem:[#allocation5 + $0xc8] sm:$0xff]
    %v236 = vld [vmem:[#allocation5 + $0xd0] sm:$0xff]
    %v237 = vld [vmem:[#allocation5 + $0xd8] sm:$0xff]
    %v238 = vld [vmem:[#allocation5 + $0xe0] sm:$0xff]
    %v239 = vld [vmem:[#allocation5 + $0xe8] sm:$0xff]
    %v240 = vld [vmem:[#allocation5 + $0xf0] sm:$0xff]
    %v241 = vld [vmem:[#allocation5 + $0xf8] sm:$0xff]
    %v242 = vld [vmem:[#allocation5 + $0x100] sm:$0xff]
    %v243 = vld [vmem:[#allocation5 + $0x108] sm:$0xff]
    %v244 = vld [vmem:[#allocation5 + $0x110] sm:$0xff]
    %v245 = vld [vmem:[#allocation5 + $0x118] sm:$0xff]
    %v246 = vld [vmem:[#allocation5 + $0x120] sm:$0xff]
    %v247 = vld [vmem:[#allocation5 + $0x128] sm:$0xff]
    %v248 = vld [vmem:[#allocation5 + $0x130] sm:$0xff]
    %v249 = vld [vmem:[#allocation5 + $0x138] sm:$0xff]
    %v250 = vld [vmem:[#allocation5 + $0x140] sm:$0xff]
    %v251 = vld [vmem:[#allocation5 + $0x148] sm:$0xff]
    %v252 = vld [vmem:[#allocation5 + $0x150] sm:$0xff]
    %v253 = vld [vmem:[#allocation5 + $0x158] sm:$0xff]
    %v254 = vld [vmem:[#allocation5 + $0x160] sm:$0xff]
    %v255 = vld [vmem:[#allocation5 + $0x168] sm:$0xff]
    %v256 = vld [vmem:[#allocation5 + $0x170] sm:$0xff]
    %v257 = vld [vmem:[#allocation5 + $0x178] sm:$0xff]
    %v258 = vld [vmem:[#allocation5 + $0x180] sm:$0xff]
    %v259 = vld [vmem:[#allocation5 + $0x188] sm:$0xff]
    %v260 = vld [vmem:[#allocation5 + $0x190] sm:$0xff]
    %v261 = vld [vmem:[#allocation5 + $0x198] sm:$0xff]
    %v262 = vld [vmem:[#allocation5 + $0x1a0] sm:$0xff]
    %v263 = vld [vmem:[#allocation5 + $0x1a8] sm:$0xff]
    %v264 = vld [vmem:[#allocation5 + $0x1b0] sm:$0xff]
    %v265 = vld [vmem:[#allocation5 + $0x1b8] sm:$0xff]
    %v266 = vld [vmem:[#allocation5 + $0x1c0] sm:$0xff]
    %v267 = vld [vmem:[#allocation5 + $0x1c8] sm:$0xff]
    %v268 = vld [vmem:[#allocation5 + $0x1d0] sm:$0xff]
    %v269 = vld [vmem:[#allocation5 + $0x1d8] sm:$0xff]
    %v270 = vld [vmem:[#allocation5 + $0x1e0] sm:$0xff]
    %v271 = vld [vmem:[#allocation5 + $0x1e8] sm:$0xff]
    %v272 = vld [vmem:[#allocation5 + $0x1f0] sm:$0xff]
    %v273 = vld [vmem:[#allocation5 + $0x1f8] sm:$0xff]
    %v274 = vld [vmem:[%s4] sm:$0x1]
    %v276 = vperm.slane %v274, 0
    %278 = vmatpush.msra.mxu0 %v225
    %279 = vmatpush.msra.mxu0 %v224
    %280 = vmatpush.msra.mxu0 %v223
    %281 = vmatpush.msra.mxu0 %v222
    %282 = vmatpush.msra.mxu0 %v221
    %283 = vmatpush.msra.mxu0 %v220
    %284 = vmatpush.msra.mxu0 %v219
    %285 = vmatpush.msra.mxu0 %v218
    %286 = vmatpush.msra.mxu0 %v217
    %287 = vmatpush.msra.mxu0 %v216
    %288 = vmatpush.msra.mxu0 %v215
    %289 = vmatpush.msra.mxu0 %v214
    %290 = vmatpush.msra.mxu0 %v213
    %291 = vmatpush.msra.mxu0 %v212
    %292 = vmatpush.msra.mxu0 %v211
    %293 = vmatpush.msra.mxu0 %v210
    %294 = vmatmul.f32.gmra.mxu0 %v202
    %v295 = vpop.f32.mrf.mxu0
    %v296 = vadd.f32 %v276, %v295
    %297 = vmatmul.f32.gmra.mxu0 %v206
    %v298 = vpop.f32.mrf.mxu0
    %v299 = vadd.f32 %v276, %v298
    %300 = vdwg.mxu0
    %301 = vmatpush.msra.mxu0 %v241
    %302 = vmatpush.msra.mxu0 %v240
    %303 = vmatpush.msra.mxu0 %v239
    %304 = vmatpush.msra.mxu0 %v238
    %305 = vmatpush.msra.mxu0 %v237
    %306 = vmatpush.msra.mxu0 %v236
    %307 = vmatpush.msra.mxu0 %v235
    %308 = vmatpush.msra.mxu0 %v234
    %309 = vmatpush.msra.mxu0 %v233
    %310 = vmatpush.msra.mxu0 %v232
    %311 = vmatpush.msra.mxu0 %v231
    %312 = vmatpush.msra.mxu0 %v230
    %313 = vmatpush.msra.mxu0 %v229
    %314 = vmatpush.msra.mxu0 %v228
    %315 = vmatpush.msra.mxu0 %v227
    %316 = vmatpush.msra.mxu0 %v226
    %317 = vmatmul.f32.gmra.mxu0 %v203
    %v318 = vpop.f32.mrf.mxu0
    %v319 = vadd.f32 %v296, %v318
    %320 = vmatmul.f32.gmra.mxu0 %v207
    %v321 = vpop.f32.mrf.mxu0
    %v322 = vadd.f32 %v299, %v321
    %323 = vdwg.mxu0
    %324 = vmatpush.msra.mxu0 %v257
    %325 = vmatpush.msra.mxu0 %v256
    %326 = vmatpush.msra.mxu0 %v255
    %327 = vmatpush.msra.mxu0 %v254
    %328 = vmatpush.msra.mxu0 %v253
    %329 = vmatpush.msra.mxu0 %v252
    %330 = vmatpush.msra.mxu0 %v251
    %331 = vmatpush.msra.mxu0 %v250
    %332 = vmatpush.msra.mxu0 %v249
    %333 = vmatpush.msra.mxu0 %v248
    %334 = vmatpush.msra.mxu0 %v247
    %335 = vmatpush.msra.mxu0 %v246
    %336 = vmatpush.msra.mxu0 %v245
    %337 = vmatpush.msra.mxu0 %v244
    %338 = vmatpush.msra.mxu0 %v243
    %339 = vmatpush.msra.mxu0 %v242
    %340 = vmatmul.f32.gmra.mxu0 %v204
    %v341 = vpop.f32.mrf.mxu0
    %v342 = vadd.f32 %v319, %v341
    %343 = vmatmul.f32.gmra.mxu0 %v208
    %v344 = vpop.f32.mrf.mxu0
    %v345 = vadd.f32 %v322, %v344
    %346 = vdwg.mxu0
    %347 = vmatpush.msra.mxu0 %v273
    %348 = vmatpush.msra.mxu0 %v272
    %349 = vmatpush.msra.mxu0 %v271
    %350 = vmatpush.msra.mxu0 %v270
    %351 = vmatpush.msra.mxu0 %v269
    %352 = vmatpush.msra.mxu0 %v268
    %353 = vmatpush.msra.mxu0 %v267
    %354 = vmatpush.msra.mxu0 %v266
    %355 = vmatpush.msra.mxu0 %v265
    %356 = vmatpush.msra.mxu0 %v264
    %357 = vmatpush.msra.mxu0 %v263
    %358 = vmatpush.msra.mxu0 %v262
    %359 = vmatpush.msra.mxu0 %v261
    %360 = vmatpush.msra.mxu0 %v260
    %361 = vmatpush.msra.mxu0 %v259
    %362 = vmatpush.msra.mxu0 %v258
    %363 = vmatmul.f32.gmra.mxu0 %v205
    %v364 = vpop.f32.mrf.mxu0
    %v365 = vadd.f32 %v342, %v364
    %366 = vmatmul.f32.gmra.mxu0 %v209
    %v367 = vpop.f32.mrf.mxu0
    %v368 = vadd.f32 %v345, %v367
    %369 = vdwg.mxu0
    %v370 = vmax.f32 %v365, 0.0
    %v371 = vmax.f32 %v368, 0.0
    %v372 = vld [vmem:[%s5] sm:$0xff]
    %v373 = vld [vmem:[%s5 + $0x8] sm:$0xff]
    %v374 = vld [vmem:[%s5 + $0x10] sm:$0xff]
    %v375 = vld [vmem:[%s5 + $0x18] sm:$0xff]
    %v376 = vld [vmem:[%s5 + $0x20] sm:$0xff]
    %v377 = vld [vmem:[%s5 + $0x28] sm:$0xff]
    %v378 = vld [vmem:[%s5 + $0x30] sm:$0xff]
    %v379 = vld [vmem:[%s5 + $0x38] sm:$0xff]
    %v380 = vld [vmem:[%s5 + $0x40] sm:$0xff]
    %v381 = vld [vmem:[%s5 + $0x48] sm:$0xff]
    %v382 = vld [vmem:[%s5 + $0x50] sm:$0xff]
    %v383 = vld [vmem:[%s5 + $0x58] sm:$0xff]
    %v384 = vld [vmem:[%s5 + $0x60] sm:$0xff]
    %v385 = vld [vmem:[%s5 + $0x68] sm:$0xff]
    %v386 = vld [vmem:[%s5 + $0x70] sm:$0xff]
    %v387 = vld [vmem:[%s5 + $0x78] sm:$0xff]
    %v388 = vld [vmem:[%s6] sm:$0x1]
    %v390 = vperm.slane %v388, 0
    %392 = vmatpush.msra.mxu0 %v387
    %393 = vmatpush.msra.mxu0 %v386
    %394 = vmatpush.msra.mxu0 %v385
    %395 = vmatpush.msra.mxu0 %v384
    %396 = vmatpush.msra.mxu0 %v383
    %397 = vmatpush.msra.mxu0 %v382
    %398 = vmatpush.msra.mxu0 %v381
    %399 = vmatpush.msra.mxu0 %v380
    %400 = vmatpush.msra.mxu0 %v379
    %401 = vmatpush.msra.mxu0 %v378
    %402 = vmatpush.msra.mxu0 %v377
    %403 = vmatpush.msra.mxu0 %v376
    %404 = vmatpush.msra.mxu0 %v375
    %405 = vmatpush.msra.mxu0 %v374
    %406 = vmatpush.msra.mxu0 %v373
    %407 = vmatpush.msra.mxu0 %v372
    %408 = vmatmul.f32.gmra.mxu0 %v370
    %v409 = vpop.f32.mrf.mxu0
    %v410 = vadd.f32 %v390, %v409
    %411 = vmatmul.f32.gmra.mxu0 %v371
    %v412 = vpop.f32.mrf.mxu0
    %v413 = vadd.f32 %v390, %v412
    %414 = vdwg.mxu0
    %vm415 = vcmask 130048
    %416 = vst.msk [vmem:[#allocation7] sm:$0xff] %vm415, %v410
    %417 = vst.msk [vmem:[#allocation7 + $0x8] sm:$0xff] %vm415, %v413
    // Predicated region
    $region38: #{tpu_custom_call.1} parent=1 // pred_check
      _
    $region39: #{tpu_custom_call.1} parent=1 // pred_check_branch
      %419 = sbr.rel (0) target = $region41
    $region40: #{tpu_custom_call.1} parent=1 // pred_region
      %421 = vsyncadd [#allocation4], 0
      %s422 = sshll.u32 [#allocation7], 4
      %s423 = int_to_ptr.vmem [resolvable:$true] %s422
      %s424 = sshll.u32 %s7, 4
      %s425 = int_to_ptr.hbm [resolvable:$true] %s424
      %430 = dma.vmem_to_hbm [thread:$0]  %s423, 256, %s425, [#allocation4], 128, 128, 8
    $region41: #{tpu_custom_call.1} parent=1 // pred_fallthru
      _
    // Predicated region
    $region42: #{tpu_custom_call.1} parent=1 // pred_check
      _
    $region43: #{tpu_custom_call.1} parent=1 // pred_check_branch
      %432 = sbr.rel (0) target = $region45
    $region44: #{tpu_custom_call.1} parent=1 // pred_region
      %434 = dma.done [#allocation4], 256
    $region45: #{tpu_custom_call.1} parent=1 // pred_fallthru
      _
    %435 = vsyncpa [#allocation3], 1
    %436 = vsyncpa [#allocation6], 1
    %437 = vsyncpa [#allocation4], 1

</llo_original>
